<compile_context>
chip_gen: v5e
topology: v5e:2x2
jax: 0.10.0
libtpu: 0.0.40
codegen_flags: <defaults>
</compile_context>

<pallas_src>
import math

import jax
import jax.numpy as jnp
from jax.experimental import pallas as pl
from jax.experimental.pallas import tpu as pltpu

MAX_PERIOD = 10000.0


def _context_embedding_kernel(t_ref, freqs_ref, phase_ref, w1_ref, b1_ref,
                              w2_ref, b2_ref, o_ref):
    # t_ref: (TB, 1); freqs_ref/phase_ref: (1, time_dim) -> broadcast to (TB, time_dim).
    # Columns [0:half] give sin(t*f); columns [half:] give sin(t*f + pi/2) == cos(t*f),
    # matching torch.cat((sin, cos), dim=-1) without any lane-axis concat.
    emb = jnp.sin(t_ref[...] * freqs_ref[...] + phase_ref[...])

    # First linear + SiLU (single full-K MXU matmul).
    h = jnp.dot(emb, w1_ref[...], preferred_element_type=jnp.float32) + b1_ref[...]
    h = h * jax.nn.sigmoid(h)

    # Second linear.
    out = jnp.dot(h, w2_ref[...], preferred_element_type=jnp.float32) + b2_ref[...]
    o_ref[...] = out.astype(o_ref.dtype)


def _round_up(x, m):
    return ((x + m - 1) // m) * m


def _default_num_tiles(batch):
    """1 tile on single-TC chips (v5e/v6e); 2 tiles on v7x (2 TensorCores/chip)."""
    try:
        kind = jax.devices()[0].device_kind.lower()
    except Exception:  # pragma: no cover - defensive
        kind = ""
    if "v7" in kind and batch >= 16:
        return 2
    return 1


def context_embedding(t, w1, b1, w2, b2, *, num_tiles=None):
    """t: (B,) float32 timesteps. w1: (time_dim, 4*time_dim), w2: (4*time_dim, time_dim).

    Returns (B, time_dim) float32, matching the PyTorch ContextEmbedding forward.
    """
    B = t.shape[0]
    time_dim, hidden = w1.shape
    assert time_dim % 2 == 0 and time_dim > 2, "time_dim must be even and > 2"
    half = time_dim // 2

    # Constant frequency + phase rows (computed once, outside the kernel).
    scale = math.log(MAX_PERIOD) / (half - 1)
    freqs = jnp.exp(jnp.arange(half, dtype=jnp.float32) * -scale)
    freqs2 = jnp.concatenate([freqs, freqs]).reshape(1, time_dim)
    phase = jnp.concatenate([
        jnp.zeros((half,), jnp.float32),
        jnp.full((half,), math.pi / 2, jnp.float32),
    ]).reshape(1, time_dim)

    b1_2d = b1.reshape(1, hidden)
    b2_2d = b2.reshape(1, time_dim)
    t2d = t.reshape(B, 1).astype(jnp.float32)

    # Grid-step count: as few as possible (grid iterations serialize on one TC).
    if num_tiles is None:
        num_tiles = _default_num_tiles(B)
    num_tiles = max(1, min(int(num_tiles), pl.cdiv(B, 8)))

    if num_tiles == 1:
        tb = B  # full-array block: no (8,128) constraint, no padding needed
    else:
        tb = _round_up(pl.cdiv(B, num_tiles), 8)
    grid = (pl.cdiv(B, tb),)

    out = pl.pallas_call(
        _context_embedding_kernel,
        out_shape=jax.ShapeDtypeStruct((B, time_dim), jnp.float32),
        grid=grid,
        in_specs=[
            pl.BlockSpec((tb, 1), lambda i: (i, 0)),             # t tile
            pl.BlockSpec((1, time_dim), lambda i: (0, 0)),        # freqs row (resident)
            pl.BlockSpec((1, time_dim), lambda i: (0, 0)),        # phase row (resident)
            pl.BlockSpec((time_dim, hidden), lambda i: (0, 0)),   # W1 (resident)
            pl.BlockSpec((1, hidden), lambda i: (0, 0)),          # b1
            pl.BlockSpec((hidden, time_dim), lambda i: (0, 0)),   # W2 (resident)
            pl.BlockSpec((1, time_dim), lambda i: (0, 0)),        # b2
        ],
        out_specs=pl.BlockSpec((tb, time_dim), lambda i: (i, 0)),
        compiler_params=pltpu.CompilerParams(
            dimension_semantics=("parallel",)),
    )(t2d, freqs2, phase, w1, b1_2d, w2, b2_2d)

    return out


def _init_linear(key, fan_in, fan_out):
    # Deterministic init mimicking torch.nn.Linear: U(-1/sqrt(fan_in), 1/sqrt(fan_in))
    kw, kb = jax.random.split(key)
    bound = 1.0 / math.sqrt(fan_in)
    w = jax.random.uniform(kw, (fan_in, fan_out), jnp.float32, -bound, bound)
    b = jax.random.uniform(kb, (fan_out,), jnp.float32, -bound, bound)
    return w, b


def _reference(t, w1, b1, w2, b2):
    time_dim = w1.shape[0]
    half = time_dim // 2
    scale = math.log(MAX_PERIOD) / (half - 1)
    freqs = jnp.exp(jnp.arange(half, dtype=jnp.float32) * -scale)
    args = t[:, None] * freqs[None, :]
    emb = jnp.concatenate([jnp.sin(args), jnp.cos(args)], axis=-1)
    h = emb @ w1 + b1
    h = h * jax.nn.sigmoid(h)
    return h @ w2 + b2


if __name__ == "__main__":
    B = 16
    TIME_DIM = 32

    key = jax.random.PRNGKey(0)
    k_t, k_l1, k_l2 = jax.random.split(key, 3)

    t = jax.random.uniform(k_t, (B,), jnp.float32, 0.0, 1000.0)
    w1, b1 = _init_linear(k_l1, TIME_DIM, TIME_DIM * 4)
    w2, b2 = _init_linear(k_l2, TIME_DIM * 4, TIME_DIM)

    ref = _reference(t, w1, b1, w2, b2)

    # Default path: 1 grid step on v5e/v6e, 2 on v7x.
    out = jax.block_until_ready(context_embedding(t, w1, b1, w2, b2))
    assert out.shape == (B, TIME_DIM)
    assert jnp.allclose(out, ref, atol=1e-4, rtol=1e-4), "mismatch vs reference (default)"

    # Explicit 2-tile path (exercises the multi-step batch grid).
    out2 = jax.block_until_ready(context_embedding(t, w1, b1, w2, b2, num_tiles=2))
    assert jnp.allclose(out2, ref, atol=1e-4, rtol=1e-4), "mismatch vs reference (2 tiles)"

    # Ragged batch: exercises the pad-free partial last block (writes masked by Pallas).
    t_r = t[:13]
    ref_r = _reference(t_r, w1, b1, w2, b2)
    out_r = jax.block_until_ready(context_embedding(t_r, w1, b1, w2, b2, num_tiles=2))
    assert out_r.shape == (13, TIME_DIM)
    assert jnp.allclose(out_r, ref_r, atol=1e-4, rtol=1e-4), "mismatch vs reference (ragged)"

    print("KERNEL_OK")
</pallas_src>

<mosaic_0001>
module attributes {stable_mosaic.version = 11 : i64} {
  func.func @_context_embedding_kernel(%arg0: i32, %arg1: memref<16x1xf32, #tpu.memory_space<vmem>>, %arg2: memref<1x32xf32, #tpu.memory_space<vmem>>, %arg3: memref<1x32xf32, #tpu.memory_space<vmem>>, %arg4: memref<32x128xf32, #tpu.memory_space<vmem>>, %arg5: memref<1x128xf32, #tpu.memory_space<vmem>>, %arg6: memref<128x32xf32, #tpu.memory_space<vmem>>, %arg7: memref<1x32xf32, #tpu.memory_space<vmem>>, %arg8: memref<16x32xf32, #tpu.memory_space<vmem>>) attributes {dimension_semantics = [#tpu.dimension_semantics<parallel>], iteration_bounds = array<i64: 1>, scalar_prefetch = 0 : i64, scratch_operands = 0 : i64, tpu.core_type = #tpu.core_type<tc>, window_params = [{transform_indices = @transform_0, window_bounds = array<i64: 16, 1>}, {pipeline_mode = #tpu.pipeline_mode<synchronous>, transform_indices = @transform_1, window_bounds = array<i64: 1, 32>}, {pipeline_mode = #tpu.pipeline_mode<synchronous>, transform_indices = @transform_2, window_bounds = array<i64: 1, 32>}, {pipeline_mode = #tpu.pipeline_mode<synchronous>, transform_indices = @transform_3, window_bounds = array<i64: 32, 128>}, {pipeline_mode = #tpu.pipeline_mode<synchronous>, transform_indices = @transform_4, window_bounds = array<i64: 1, 128>}, {pipeline_mode = #tpu.pipeline_mode<synchronous>, transform_indices = @transform_5, window_bounds = array<i64: 128, 32>}, {pipeline_mode = #tpu.pipeline_mode<synchronous>, transform_indices = @transform_6, window_bounds = array<i64: 1, 32>}, {transform_indices = @transform_7, window_bounds = array<i64: 16, 32>}]} {
    %c0 = arith.constant 0 : index
    %c0_0 = arith.constant 0 : index
    %0 = vector.load %arg1[%c0, %c0_0] : memref<16x1xf32, #tpu.memory_space<vmem>>, vector<16x1xf32>
    %c0_1 = arith.constant 0 : index
    %c0_2 = arith.constant 0 : index
    %1 = vector.load %arg2[%c0_1, %c0_2] : memref<1x32xf32, #tpu.memory_space<vmem>>, vector<1x32xf32>
    %2 = vector.broadcast %0 : vector<16x1xf32> to vector<16x32xf32>
    %3 = vector.broadcast %1 : vector<1x32xf32> to vector<16x32xf32>
    %4 = arith.mulf %2, %3 : vector<16x32xf32>
    %c0_3 = arith.constant 0 : index
    %c0_4 = arith.constant 0 : index
    %5 = vector.load %arg3[%c0_3, %c0_4] : memref<1x32xf32, #tpu.memory_space<vmem>>, vector<1x32xf32>
    %6 = vector.broadcast %5 : vector<1x32xf32> to vector<16x32xf32>
    %7 = arith.addf %4, %6 : vector<16x32xf32>
    %8 = math.sin %7 : vector<16x32xf32>
    %c0_5 = arith.constant 0 : index
    %c0_6 = arith.constant 0 : index
    %9 = vector.load %arg4[%c0_5, %c0_6] : memref<32x128xf32, #tpu.memory_space<vmem>>, vector<32x128xf32>
    %cst = arith.constant dense<0.000000e+00> : vector<16x128xf32>
    %10 = tpu.matmul %8, %9, %cst {dimension_numbers = #tpu.dot_dimension_numbers<[1], [0], [0], [1], [0, 0, 1, 1], [], []>} : vector<16x32xf32>, vector<32x128xf32>, vector<16x128xf32> -> vector<16x128xf32>
    %c0_7 = arith.constant 0 : index
    %c0_8 = arith.constant 0 : index
    %11 = vector.load %arg5[%c0_7, %c0_8] : memref<1x128xf32, #tpu.memory_space<vmem>>, vector<1x128xf32>
    %12 = vector.broadcast %11 : vector<1x128xf32> to vector<16x128xf32>
    %13 = arith.addf %10, %12 : vector<16x128xf32>
    %14 = arith.negf %13 : vector<16x128xf32>
    %15 = math.exp %14 : vector<16x128xf32>
    %cst_9 = arith.constant 1.000000e+00 : f32
    %16 = vector.broadcast %cst_9 : f32 to vector<16x128xf32>
    %17 = arith.addf %16, %15 : vector<16x128xf32>
    %18 = arith.divf %16, %17 : vector<16x128xf32>
    %19 = arith.mulf %13, %18 : vector<16x128xf32>
    %c0_10 = arith.constant 0 : index
    %c0_11 = arith.constant 0 : index
    %20 = vector.load %arg6[%c0_10, %c0_11] : memref<128x32xf32, #tpu.memory_space<vmem>>, vector<128x32xf32>
    %cst_12 = arith.constant dense<0.000000e+00> : vector<16x32xf32>
    %21 = tpu.matmul %19, %20, %cst_12 {dimension_numbers = #tpu.dot_dimension_numbers<[1], [0], [0], [1], [0, 0, 1, 1], [], []>} : vector<16x128xf32>, vector<128x32xf32>, vector<16x32xf32> -> vector<16x32xf32>
    %c0_13 = arith.constant 0 : index
    %c0_14 = arith.constant 0 : index
    %22 = vector.load %arg7[%c0_13, %c0_14] : memref<1x32xf32, #tpu.memory_space<vmem>>, vector<1x32xf32>
    %23 = vector.broadcast %22 : vector<1x32xf32> to vector<16x32xf32>
    %24 = arith.addf %21, %23 : vector<16x32xf32>
    %c0_15 = arith.constant 0 : index
    %c0_16 = arith.constant 0 : index
    %25 = vector.load %arg8[%c0_15, %c0_16] : memref<16x32xf32, #tpu.memory_space<vmem>>, vector<16x32xf32>
    tpu.vector_store %arg8[%c0_15, %c0_16], %24 {strides = array<i32>} : memref<16x32xf32, #tpu.memory_space<vmem>>, vector<16x32xf32>,
    return
  }
  func.func @transform_0(%arg0: i32) -> (i32, i32) {
    %c0_i32 = arith.constant 0 : i32
    %c0_i32_0 = arith.constant 0 : i32
    return %arg0, %c0_i32 : i32, i32
  }
  func.func @transform_1(%arg0: i32) -> (i32, i32) {
    %c0_i32 = arith.constant 0 : i32
    %c0_i32_0 = arith.constant 0 : i32
    %c0_i32_1 = arith.constant 0 : i32
    return %c0_i32, %c0_i32_0 : i32, i32
  }
  func.func @transform_2(%arg0: i32) -> (i32, i32) {
    %c0_i32 = arith.constant 0 : i32
    %c0_i32_0 = arith.constant 0 : i32
    %c0_i32_1 = arith.constant 0 : i32
    return %c0_i32, %c0_i32_0 : i32, i32
  }
  func.func @transform_3(%arg0: i32) -> (i32, i32) {
    %c0_i32 = arith.constant 0 : i32
    %c0_i32_0 = arith.constant 0 : i32
    %c0_i32_1 = arith.constant 0 : i32
    return %c0_i32, %c0_i32_0 : i32, i32
  }
  func.func @transform_4(%arg0: i32) -> (i32, i32) {
    %c0_i32 = arith.constant 0 : i32
    %c0_i32_0 = arith.constant 0 : i32
    %c0_i32_1 = arith.constant 0 : i32
    return %c0_i32, %c0_i32_0 : i32, i32
  }
  func.func @transform_5(%arg0: i32) -> (i32, i32) {
    %c0_i32 = arith.constant 0 : i32
    %c0_i32_0 = arith.constant 0 : i32
    %c0_i32_1 = arith.constant 0 : i32
    return %c0_i32, %c0_i32_0 : i32, i32
  }
  func.func @transform_6(%arg0: i32) -> (i32, i32) {
    %c0_i32 = arith.constant 0 : i32
    %c0_i32_0 = arith.constant 0 : i32
    %c0_i32_1 = arith.constant 0 : i32
    return %c0_i32, %c0_i32_0 : i32, i32
  }
  func.func @transform_7(%arg0: i32) -> (i32, i32) {
    %c0_i32 = arith.constant 0 : i32
    %c0_i32_0 = arith.constant 0 : i32
    return %arg0, %c0_i32 : i32, i32
  }
}

</mosaic_0001>

<llo_original>
// kernel: tpu_custom_call.1
$region0: #{tpu_custom_call.1}
  #allocation0 [shape = 'u32[]', space=smem, size = 0x4, offset = 0x4, fixed_abs, tag = 'smem constant byte address 0x4 - core index']
  #allocation1 [shape = 'u32[72,128]{1,0:T(1,128)}', space=vmem, size = 0x9000, scoped, tag = 'internal scratch']
  %s0 = inlined_call_operand.vmem [shape: f32[16,1], index: 0, kind: input, shape index: {}]
  %s1 = inlined_call_operand.vmem [shape: f32[1,32], index: 1, kind: input, shape index: {}]
  %s2 = inlined_call_operand.vmem [shape: f32[1,32], index: 2, kind: input, shape index: {}]
  %s3 = inlined_call_operand.vmem [shape: f32[32,128], index: 3, kind: input, shape index: {}]
  %s4 = inlined_call_operand.vmem [shape: f32[1,128], index: 4, kind: input, shape index: {}]
  %s5 = inlined_call_operand.vmem [shape: f32[128,32], index: 5, kind: input, shape index: {}]
  %s6 = inlined_call_operand.vmem [shape: f32[1,32], index: 6, kind: input, shape index: {}]
  %s7 = inlined_call_operand.hbm [shape: f32[16,32], index: 7, kind: output, shape index: {}]
  %s8 = sld [smem:[#allocation0]]
  $region38: #{tpu_custom_call.1} parent=0
    _
  %s10 = ssub.s32 1, %s8
  %s11 = scalar_select 0, %s10, %s8
  $region1: #{tpu_custom_call.1} parent=0
    #allocation2 [shape = 'u8[8192]{0}', space=vmem, size = 0x2000, scoped, tag = 'output window, operand 0, single buffered']
    #allocation3 [shape = 's32[1]{0}', space=sflag, size = 0x4, scoped, tag = 'scoped memory for tpu_custom_call.1']
    %12 = vsyncpa [#allocation3], 0
    // Predicated region
    $region2: #{tpu_custom_call.1} parent=1 // pred_check
      _
    $region3: #{tpu_custom_call.1} parent=1 // pred_check_branch
      %14 = sbr.rel (0) target = $region5
    $region4: #{tpu_custom_call.1} parent=1 // pred_region
      _
    $region5: #{tpu_custom_call.1} parent=1 // pred_fallthru
      _
    // Predicated region
    $region6: #{tpu_custom_call.1} parent=1 // pred_check
      _
    $region7: #{tpu_custom_call.1} parent=1 // pred_check_branch
      %16 = sbr.rel (0) target = $region9
    $region8: #{tpu_custom_call.1} parent=1 // pred_region
      _
    $region9: #{tpu_custom_call.1} parent=1 // pred_fallthru
      _
    // Predicated region
    $region10: #{tpu_custom_call.1} parent=1 // pred_check
      _
    $region11: #{tpu_custom_call.1} parent=1 // pred_check_branch
      %18 = sbr.rel (0) target = $region13
    $region12: #{tpu_custom_call.1} parent=1 // pred_region
      _
    $region13: #{tpu_custom_call.1} parent=1 // pred_fallthru
      _
    // Predicated region
    $region14: #{tpu_custom_call.1} parent=1 // pred_check
      _
    $region15: #{tpu_custom_call.1} parent=1 // pred_check_branch
      %20 = sbr.rel (0) target = $region17
    $region16: #{tpu_custom_call.1} parent=1 // pred_region
      _
    $region17: #{tpu_custom_call.1} parent=1 // pred_fallthru
      _
    // Predicated region
    $region18: #{tpu_custom_call.1} parent=1 // pred_check
      _
    $region19: #{tpu_custom_call.1} parent=1 // pred_check_branch
      %22 = sbr.rel (0) target = $region21
    $region20: #{tpu_custom_call.1} parent=1 // pred_region
      _
    $region21: #{tpu_custom_call.1} parent=1 // pred_fallthru
      _
    // Predicated region
    $region22: #{tpu_custom_call.1} parent=1 // pred_check
      _
    $region23: #{tpu_custom_call.1} parent=1 // pred_check_branch
      %24 = sbr.rel (0) target = $region25
    $region24: #{tpu_custom_call.1} parent=1 // pred_region
      _
    $region25: #{tpu_custom_call.1} parent=1 // pred_fallthru
      _
    // Predicated region
    $region26: #{tpu_custom_call.1} parent=1 // pred_check
      _
    $region27: #{tpu_custom_call.1} parent=1 // pred_check_branch
      %26 = sbr.rel (0) target = $region29
    $region28: #{tpu_custom_call.1} parent=1 // pred_region
      _
    $region29: #{tpu_custom_call.1} parent=1 // pred_fallthru
      _
    %v27 = vld [vmem:[%s0] sm:$0xff]
    %v28 = vld [vmem:[%s0 + $0x8] sm:$0xff]
    %v29 = vld [vmem:[%s1] sm:$0x1]
    %31 = vset.pattern.permute.xlu0 0
    %32 = vperm.xlu0 %31, %v27
    %v33 = vpop.permute.xlu0 %32
    %36 = vset.pattern.permute.xlu0 0
    %37 = vperm.xlu0 %36, %v28
    %v38 = vpop.permute.xlu0 %37
    %v41 = vperm.slane %v29, 0
    %v43 = vmul.f32 %v33, %v41
    %v44 = vmul.f32 %v38, %v41
    %v45 = vld [vmem:[%s2] sm:$0x1]
    %v47 = vperm.slane %v45, 0
    %v49 = vadd.f32 %v43, %v47
    %v50 = vadd.f32 %v44, %v47
    %v51 = vand.u32 2147483647, %v49
    %vm52 = vcmp.le.f32.partialorder %v51, 0.7853982
    %vm53 = vcmp.lt.s32.totalorder %v49, 0
    %v54 = vand.u32 %v49, 2139095040
    %v55 = vshrl.u32 %v54, 23
    %v56 = vsub.s32 %v55, 127
    %v57 = vand.u32 2147483647, %v49
    %v58 = vand.u32 %v57, 8388607
    %v59 = vor.u32 %v58, 8388608
    %v60 = vsub.s32 0, %v59
    %v61 = vadd.s32 %v56, 1
    %vm62 = vcmp.gt.s32.totalorder %v61, 0
    %v63 = vsel %vm62, %v61, 0
    %v64 = vshrl.u32 %v63, 5
    %v65 = vand.u32 %v63, 31
    %v66 = vsub.s32 32, %v65
    %v67 = vshrl.u32 683565275, %v66
    %v68 = vshll.u32 683565275, %v65
    %v69 = vshrl.u32 2475754826, %v66
    %v70 = vor.u32 %v68, %v69
    %v71 = vshll.u32 2475754826, %v65
    %v72 = vshrl.u32 2131351028, %v66
    %v73 = vor.u32 %v71, %v72
    %v74 = vshll.u32 2131351028, %v65
    %v75 = vshrl.u32 2102212464, %v66
    %v76 = vor.u32 %v74, %v75
    %v77 = vshll.u32 2102212464, %v65
    %v78 = vshrl.u32 920167782, %v66
    %v79 = vor.u32 %v77, %v78
    %v80 = vshll.u32 920167782, %v65
    %v81 = vshrl.u32 1326507024, %v66
    %v82 = vor.u32 %v80, %v81
    %vm83 = vcmp.lt.s32.totalorder %v64, 1
    %vm84 = vcmp.lt.s32.totalorder %v64, 2
    %vm85 = vcmp.lt.s32.totalorder %v64, 3
    %vm86 = vcmp.lt.s32.totalorder %v64, 4
    %v87 = vsel %vm83, %v67, %v70
    %v88 = vsel %vm86, %v76, 2102212464
    %v89 = vsel %vm85, %v73, %v88
    %v90 = vsel %vm84, %v87, %v89
    %v91 = vsel %vm83, %v70, %v73
    %v92 = vsel %vm86, %v79, 920167782
    %v93 = vsel %vm85, %v76, %v92
    %v94 = vsel %vm84, %v91, %v93
    %v95 = vsel %vm83, %v73, %v76
    %v96 = vsel %vm86, %v82, 1326507024
    %v97 = vsel %vm85, %v79, %v96
    %v98 = vsel %vm84, %v95, %v97
    %v99 = vshll.u32 %v59, 8
    %v100 = vand.u32 %v99, 65535
    %v101 = vshrl.u32 %v99, 16
    %v102 = vand.u32 %v98, 65535
    %v103 = vshrl.u32 %v98, 16
    %v104 = vmul.u32 %v100, %v102
    %v105 = vmul.u32 %v100, %v103
    %v106 = vmul.u32 %v101, %v102
    %v107 = vmul.u32 %v101, %v103
    %v108 = vshll.u32 %v105, 16
    %v109 = vshrl.u32 %v105, 16
    %v110 = vshll.u32 %v106, 16
    %v111 = vshrl.u32 %v106, 16
    %vm112 = vc.u32 %v104, %v108
    %v113 = vsel %vm112, 1, 0
    %v114 = vadd.s32 %v104, %v108
    %v115 = vadd.s32 %v107, %v113
    %vm116 = vc.u32 %v114, %v110
    %v117 = vsel %vm116, 1, 0
    %v118 = vadd.s32 %v114, %v110
    %v119 = vadd.s32 %v115, %v117
    %v120 = vadd.s32 %v119, %v109
    %v121 = vadd.s32 %v120, %v111
    %v122 = vand.u32 %v99, 65535
    %v123 = vshrl.u32 %v99, 16
    %v124 = vand.u32 %v94, 65535
    %v125 = vshrl.u32 %v94, 16
    %v126 = vmul.u32 %v122, %v124
    %v127 = vmul.u32 %v122, %v125
    %v128 = vmul.u32 %v123, %v124
    %v129 = vmul.u32 %v123, %v125
    %v130 = vshll.u32 %v127, 16
    %v131 = vshrl.u32 %v127, 16
    %v132 = vshll.u32 %v128, 16
    %v133 = vshrl.u32 %v128, 16
    %vm134 = vc.u32 %v126, %v130
    %v135 = vsel %vm134, 1, 0
    %v136 = vadd.s32 %v126, %v130
    %v137 = vadd.s32 %v129, %v135
    %vm138 = vc.u32 %v136, %v132
    %v139 = vsel %vm138, 1, 0
    %v140 = vadd.s32 %v136, %v132
    %v141 = vadd.s32 %v137, %v139
    %v142 = vadd.s32 %v141, %v131
    %v143 = vadd.s32 %v142, %v133
    %v144 = vmul.u32 %v99, %v90
    %v145 = vadd.s32 %v121, %v140
    %vm146 = vc.u32 %v121, %v140
    %v147 = vadd.s32 %v143, 1
    %v148 = vsel %vm146, %v147, %v143
    %v149 = vadd.s32 %v144, %v148
    %v150 = vadd.s32 %v149, 536870912
    %v151 = vshrl.u32 %v150, 30
    %v152 = vshll.u32 %v151, 30
    %v153 = vsub.s32 %v149, %v152
    %vm154 = vcmp.lt.s32.totalorder %v153, 0
    %v155 = vsub.s32 0, %v153
    %v156 = vsel %vm154, %v155, %v153
    %v157 = vclz %v156
    %v158 = vsub.s32 %v157, 2
    %vm159 = vcmp.gt.s32.totalorder 0, %v158
    %v160 = vsel %vm159, 0, %v158
    %v161 = vsub.s32 32, %v160
    %v162 = vshll.u32 %v153, %v160
    %v163 = vshrl.u32 %v145, %v161
    %v164 = vor.u32 %v162, %v163
    %v165 = vsub.s32 4294967266, %v160
    %v166 = vadd.s32 %v165, 127
    %v167 = vshll.u32 %v166, 23
    %v168 = vor.u32 4788187, %v167
    %v169 = vand.u32 2147483647, %v168
    %v171 = vcvt.s32.f32 %v164
    %v172 = vmul.f32 %v171, %v169
    %v173 = vxor.u32 %v172, 2147483648
    %v174 = vsel %vm53, %v173, %v172
    %v175 = vsub.s32 4, %v151
    %v176 = vsel %vm53, %v175, %v151
    %v177 = vsel %vm52, %v49, %v174
    %v178 = vsel %vm52, 0, %v176
    %v179 = vmul.f32 %v177, %v177
    %v180 = vmul.f32 %v179, -0.001358992
    %v181 = vadd.f32 %v180, 0.041655596
    %v182 = vmul.f32 %v179, %v181
    %v183 = vadd.f32 %v182, -0.4999988
    %v184 = vmul.f32 %v179, %v183
    %v185 = vadd.f32 1.0, %v184
    %v186 = vmul.f32 %v177, %v177
    %v187 = vmul.f32 %v186, -0.00019511016
    %v188 = vadd.f32 %v187, 0.008332121
    %v189 = vmul.f32 %v186, %v188
    %v190 = vadd.f32 %v189, -0.16666654
    %v191 = vmul.f32 %v186, %v190
    %v192 = vadd.f32 %v191, 1.0
    %v193 = vmul.f32 %v192, %v177
    %vm194 = vweird.f32 %v49
    %v195 = vadd.s32 %v178, 3
    %v196 = vand.u32 %v195, 3
    %vm197 = vcmp.lt.s32.totalorder %v196, 2
    %vm198 = vcmp.eq.s32.totalorder %v196, 0
    %v199 = vxor.u32 %v193, 2147483648
    %v200 = vsel %vm198, %v185, %v199
    %vm201 = vcmp.eq.s32.totalorder %v196, 2
    %v202 = vxor.u32 %v185, 2147483648
    %v203 = vsel %vm201, %v202, %v193
    %v204 = vsel %vm197, %v200, %v203
    %v205 = vsel %vm194, nan, %v204
    %v206 = vand.u32 2147483647, %v50
    %vm207 = vcmp.le.f32.partialorder %v206, 0.7853982
    %vm208 = vcmp.lt.s32.totalorder %v50, 0
    %v209 = vand.u32 %v50, 2139095040
    %v210 = vshrl.u32 %v209, 23
    %v211 = vsub.s32 %v210, 127
    %v212 = vand.u32 2147483647, %v50
    %v213 = vand.u32 %v212, 8388607
    %v214 = vor.u32 %v213, 8388608
    %v215 = vsub.s32 0, %v214
    %v216 = vadd.s32 %v211, 1
    %vm217 = vcmp.gt.s32.totalorder %v216, 0
    %v218 = vsel %vm217, %v216, 0
    %v219 = vshrl.u32 %v218, 5
    %v220 = vand.u32 %v218, 31
    %v221 = vsub.s32 32, %v220
    %v222 = vshrl.u32 683565275, %v221
    %v223 = vshll.u32 683565275, %v220
    %v224 = vshrl.u32 2475754826, %v221
    %v225 = vor.u32 %v223, %v224
    %v226 = vshll.u32 2475754826, %v220
    %v227 = vshrl.u32 2131351028, %v221
    %v228 = vor.u32 %v226, %v227
    %v229 = vshll.u32 2131351028, %v220
    %v230 = vshrl.u32 2102212464, %v221
    %v231 = vor.u32 %v229, %v230
    %v232 = vshll.u32 2102212464, %v220
    %v233 = vshrl.u32 920167782, %v221
    %v234 = vor.u32 %v232, %v233
    %v235 = vshll.u32 920167782, %v220
    %v236 = vshrl.u32 1326507024, %v221
    %v237 = vor.u32 %v235, %v236
    %vm238 = vcmp.lt.s32.totalorder %v219, 1
    %vm239 = vcmp.lt.s32.totalorder %v219, 2
    %vm240 = vcmp.lt.s32.totalorder %v219, 3
    %vm241 = vcmp.lt.s32.totalorder %v219, 4
    %v242 = vsel %vm238, %v222, %v225
    %v243 = vsel %vm241, %v231, 2102212464
    %v244 = vsel %vm240, %v228, %v243
    %v245 = vsel %vm239, %v242, %v244
    %v246 = vsel %vm238, %v225, %v228
    %v247 = vsel %vm241, %v234, 920167782
    %v248 = vsel %vm240, %v231, %v247
    %v249 = vsel %vm239, %v246, %v248
    %v250 = vsel %vm238, %v228, %v231
    %v251 = vsel %vm241, %v237, 1326507024
    %v252 = vsel %vm240, %v234, %v251
    %v253 = vsel %vm239, %v250, %v252
    %v254 = vshll.u32 %v214, 8
    %v255 = vand.u32 %v254, 65535
    %v256 = vshrl.u32 %v254, 16
    %v257 = vand.u32 %v253, 65535
    %v258 = vshrl.u32 %v253, 16
    %v259 = vmul.u32 %v255, %v257
    %v260 = vmul.u32 %v255, %v258
    %v261 = vmul.u32 %v256, %v257
    %v262 = vmul.u32 %v256, %v258
    %v263 = vshll.u32 %v260, 16
    %v264 = vshrl.u32 %v260, 16
    %v265 = vshll.u32 %v261, 16
    %v266 = vshrl.u32 %v261, 16
    %vm267 = vc.u32 %v259, %v263
    %v268 = vsel %vm267, 1, 0
    %v269 = vadd.s32 %v259, %v263
    %v270 = vadd.s32 %v262, %v268
    %vm271 = vc.u32 %v269, %v265
    %v272 = vsel %vm271, 1, 0
    %v273 = vadd.s32 %v269, %v265
    %v274 = vadd.s32 %v270, %v272
    %v275 = vadd.s32 %v274, %v264
    %v276 = vadd.s32 %v275, %v266
    %v277 = vand.u32 %v254, 65535
    %v278 = vshrl.u32 %v254, 16
    %v279 = vand.u32 %v249, 65535
    %v280 = vshrl.u32 %v249, 16
    %v281 = vmul.u32 %v277, %v279
    %v282 = vmul.u32 %v277, %v280
    %v283 = vmul.u32 %v278, %v279
    %v284 = vmul.u32 %v278, %v280
    %v285 = vshll.u32 %v282, 16
    %v286 = vshrl.u32 %v282, 16
    %v287 = vshll.u32 %v283, 16
    %v288 = vshrl.u32 %v283, 16
    %vm289 = vc.u32 %v281, %v285
    %v290 = vsel %vm289, 1, 0
    %v291 = vadd.s32 %v281, %v285
    %v292 = vadd.s32 %v284, %v290
    %vm293 = vc.u32 %v291, %v287
    %v294 = vsel %vm293, 1, 0
    %v295 = vadd.s32 %v291, %v287
    %v296 = vadd.s32 %v292, %v294
    %v297 = vadd.s32 %v296, %v286
    %v298 = vadd.s32 %v297, %v288
    %v299 = vmul.u32 %v254, %v245
    %v300 = vadd.s32 %v276, %v295
    %vm301 = vc.u32 %v276, %v295
    %v302 = vadd.s32 %v298, 1
    %v303 = vsel %vm301, %v302, %v298
    %v304 = vadd.s32 %v299, %v303
    %v305 = vadd.s32 %v304, 536870912
    %v306 = vshrl.u32 %v305, 30
    %v307 = vshll.u32 %v306, 30
    %v308 = vsub.s32 %v304, %v307
    %vm309 = vcmp.lt.s32.totalorder %v308, 0
    %v310 = vsub.s32 0, %v308
    %v311 = vsel %vm309, %v310, %v308
    %v312 = vclz %v311
    %v313 = vsub.s32 %v312, 2
    %vm314 = vcmp.gt.s32.totalorder 0, %v313
    %v315 = vsel %vm314, 0, %v313
    %v316 = vsub.s32 32, %v315
    %v317 = vshll.u32 %v308, %v315
    %v318 = vshrl.u32 %v300, %v316
    %v319 = vor.u32 %v317, %v318
    %v320 = vsub.s32 4294967266, %v315
    %v321 = vadd.s32 %v320, 127
    %v322 = vshll.u32 %v321, 23
    %v323 = vor.u32 4788187, %v322
    %v324 = vand.u32 2147483647, %v323
    %v326 = vcvt.s32.f32 %v319
    %v327 = vmul.f32 %v326, %v324
    %v328 = vxor.u32 %v327, 2147483648
    %v329 = vsel %vm208, %v328, %v327
    %v330 = vsub.s32 4, %v306
    %v331 = vsel %vm208, %v330, %v306
    %v332 = vsel %vm207, %v50, %v329
    %v333 = vsel %vm207, 0, %v331
    %v334 = vmul.f32 %v332, %v332
    %v335 = vmul.f32 %v334, -0.001358992
    %v336 = vadd.f32 %v335, 0.041655596
    %v337 = vmul.f32 %v334, %v336
    %v338 = vadd.f32 %v337, -0.4999988
    %v339 = vmul.f32 %v334, %v338
    %v340 = vadd.f32 1.0, %v339
    %v341 = vmul.f32 %v332, %v332
    %v342 = vmul.f32 %v341, -0.00019511016
    %v343 = vadd.f32 %v342, 0.008332121
    %v344 = vmul.f32 %v341, %v343
    %v345 = vadd.f32 %v344, -0.16666654
    %v346 = vmul.f32 %v341, %v345
    %v347 = vadd.f32 %v346, 1.0
    %v348 = vmul.f32 %v347, %v332
    %vm349 = vweird.f32 %v50
    %v350 = vadd.s32 %v333, 3
    %v351 = vand.u32 %v350, 3
    %vm352 = vcmp.lt.s32.totalorder %v351, 2
    %vm353 = vcmp.eq.s32.totalorder %v351, 0
    %v354 = vxor.u32 %v348, 2147483648
    %v355 = vsel %vm353, %v340, %v354
    %vm356 = vcmp.eq.s32.totalorder %v351, 2
    %v357 = vxor.u32 %v340, 2147483648
    %v358 = vsel %vm356, %v357, %v348
    %v359 = vsel %vm352, %v355, %v358
    %v360 = vsel %vm349, nan, %v359
    %v361 = vld [vmem:[%s3] sm:$0xff]
    %v362 = vld [vmem:[%s3 + $0x8] sm:$0xff]
    %v363 = vld [vmem:[%s3 + $0x10] sm:$0xff]
    %v364 = vld [vmem:[%s3 + $0x18] sm:$0xff]
    %v365 = vld [vmem:[%s4] sm:$0x1]
    %v367 = vperm.slane %v365, 0
    %vm369 = vcmask 261120
    %v371 = vsel %vm369, %v205, 0
    %v374 = vsel %vm369, %v360, 0
    %376 = vmatpush.msra.mxu0 0.0
    %377 = vmatpush.msra.mxu0 0.0
    %378 = vmatpush.msra.mxu0 0.0
    %379 = vmatpush.msra.mxu0 0.0
    %380 = vmatpush.msra.mxu0 0.0
    %381 = vmatpush.msra.mxu0 0.0
    %382 = vmatpush.msra.mxu0 0.0
    %383 = vmatpush.msra.mxu0 0.0
    %384 = vmatpush.msra.mxu0 0.0
    %385 = vmatpush.msra.mxu0 0.0
    %386 = vmatpush.msra.mxu0 0.0
    %387 = vmatpush.msra.mxu0 0.0
    %388 = vmatpush.msra.mxu0 %v364
    %389 = vmatpush.msra.mxu0 %v363
    %390 = vmatpush.msra.mxu0 %v362
    %391 = vmatpush.msra.mxu0 %v361
    %392 = vmatmul.f32.gmra.mxu0 %v371
    %v393 = vpop.f32.mrf.mxu0
    %v394 = vadd.f32 %v367, %v393
    %395 = vmatmul.f32.gmra.mxu0 %v374
    %v396 = vpop.f32.mrf.mxu0
    %v397 = vadd.f32 %v367, %v396
    %398 = vdwg.mxu0
    %v399 = vxor.u32 %v394, 2147483648
    %v400 = vxor.u32 %v397, 2147483648
    %v401 = vmul.f32 %v399, 1.442695
    %v402 = vpow.pop %v401
    %v403 = vmul.f32 %v400, 1.442695
    %v404 = vpow.pop %v403
    %v405 = vadd.f32 %v402, 1.0
    %v406 = vadd.f32 %v404, 1.0
    %v407 = vrcp.pop %v405
    %v408 = vmul.f32 %v405, %v407
    %v409 = vsub.f32 1.0, %v408
    %v410 = vmul.f32 %v407, %v409
    %v411 = vadd.f32 %v407, %v410
    %vm412 = vweird.f32 %v405
    %vm413 = vweird.f32 %v407
    %vm414 = vmor %vm412, %vm413
    %v415 = vsel %vm414, %v407, %v411
    %v416 = vand.u32 2147483647, %v405
    %vm417 = vcmp.eq.f32.partialorder %v416, 8.507059e+37
    %v418 = vand.u32 %v405, 2147483648
    %v419 = vor.u32 1.1754944e-38, %v418
    %v420 = vsel %vm417, %v419, %v415
    %v421 = vmul.f32 1.0, %v420
    %v422 = vrcp.pop %v406
    %v423 = vmul.f32 %v406, %v422
    %v424 = vsub.f32 1.0, %v423
    %v425 = vmul.f32 %v422, %v424
    %v426 = vadd.f32 %v422, %v425
    %vm427 = vweird.f32 %v406
    %vm428 = vweird.f32 %v422
    %vm429 = vmor %vm427, %vm428
    %v430 = vsel %vm429, %v422, %v426
    %v431 = vand.u32 2147483647, %v406
    %vm432 = vcmp.eq.f32.partialorder %v431, 8.507059e+37
    %v433 = vand.u32 %v406, 2147483648
    %v434 = vor.u32 1.1754944e-38, %v433
    %v435 = vsel %vm432, %v434, %v430
    %v436 = vmul.f32 1.0, %v435
    %v437 = vmul.f32 %v394, %v421
    %v438 = vmul.f32 %v397, %v436
    %v439 = vld [vmem:[%s5] sm:$0xff]
    %v440 = vld [vmem:[%s5 + $0x8] sm:$0xff]
    %v441 = vld [vmem:[%s5 + $0x10] sm:$0xff]
    %v442 = vld [vmem:[%s5 + $0x18] sm:$0xff]
    %v443 = vld [vmem:[%s5 + $0x20] sm:$0xff]
    %v444 = vld [vmem:[%s5 + $0x28] sm:$0xff]
    %v445 = vld [vmem:[%s5 + $0x30] sm:$0xff]
    %v446 = vld [vmem:[%s5 + $0x38] sm:$0xff]
    %v447 = vld [vmem:[%s5 + $0x40] sm:$0xff]
    %v448 = vld [vmem:[%s5 + $0x48] sm:$0xff]
    %v449 = vld [vmem:[%s5 + $0x50] sm:$0xff]
    %v450 = vld [vmem:[%s5 + $0x58] sm:$0xff]
    %v451 = vld [vmem:[%s5 + $0x60] sm:$0xff]
    %v452 = vld [vmem:[%s5 + $0x68] sm:$0xff]
    %v453 = vld [vmem:[%s5 + $0x70] sm:$0xff]
    %v454 = vld [vmem:[%s5 + $0x78] sm:$0xff]
    %v455 = vld [vmem:[%s6] sm:$0x1]
    %v457 = vperm.slane %v455, 0
    %459 = vmatpush.msra.mxu0 %v454
    %460 = vmatpush.msra.mxu0 %v453
    %461 = vmatpush.msra.mxu0 %v452
    %462 = vmatpush.msra.mxu0 %v451
    %463 = vmatpush.msra.mxu0 %v450
    %464 = vmatpush.msra.mxu0 %v449
    %465 = vmatpush.msra.mxu0 %v448
    %466 = vmatpush.msra.mxu0 %v447
    %467 = vmatpush.msra.mxu0 %v446
    %468 = vmatpush.msra.mxu0 %v445
    %469 = vmatpush.msra.mxu0 %v444
    %470 = vmatpush.msra.mxu0 %v443
    %471 = vmatpush.msra.mxu0 %v442
    %472 = vmatpush.msra.mxu0 %v441
    %473 = vmatpush.msra.mxu0 %v440
    %474 = vmatpush.msra.mxu0 %v439
    %475 = vmatmul.f32.gmra.mxu0 %v437
    %v476 = vpop.f32.mrf.mxu0
    %v477 = vadd.f32 %v457, %v476
    %478 = vmatmul.f32.gmra.mxu0 %v438
    %v479 = vpop.f32.mrf.mxu0
    %v480 = vadd.f32 %v457, %v479
    %481 = vdwg.mxu0
    %482 = vst.msk [vmem:[#allocation2] sm:$0xff] %vm369, %v477
    %483 = vst.msk [vmem:[#allocation2 + $0x8] sm:$0xff] %vm369, %v480
    // Predicated region
    $region30: #{tpu_custom_call.1} parent=1 // pred_check
      _
    $region31: #{tpu_custom_call.1} parent=1 // pred_check_branch
      %485 = sbr.rel (0) target = $region33
    $region32: #{tpu_custom_call.1} parent=1 // pred_region
      %487 = vsyncadd [#allocation3], 0
      %s488 = sshll.u32 [#allocation2], 4
      %s489 = int_to_ptr.vmem [resolvable:$true] %s488
      %s490 = sshll.u32 %s7, 4
      %s491 = int_to_ptr.hbm [resolvable:$true] %s490
      %496 = dma.vmem_to_hbm [thread:$0]  %s489, 256, %s491, [#allocation3], 128, 128, 8
    $region33: #{tpu_custom_call.1} parent=1 // pred_fallthru
      _
    // Predicated region
    $region34: #{tpu_custom_call.1} parent=1 // pred_check
      _
    $region35: #{tpu_custom_call.1} parent=1 // pred_check_branch
      %498 = sbr.rel (0) target = $region37
    $region36: #{tpu_custom_call.1} parent=1 // pred_region
      %500 = dma.done [#allocation3], 256
    $region37: #{tpu_custom_call.1} parent=1 // pred_fallthru
      _
    %501 = vsyncpa [#allocation3], 1

</llo_original>
